<compile_context>
chip_gen: v5e
topology: v5e:2x2
jax: 0.10.0
libtpu: 0.0.40
codegen_flags: <defaults>
</compile_context>

<pallas_src>
import functools

import jax
import jax.numpy as jnp
from jax.experimental import pallas as pl
from jax.experimental.pallas import tpu as pltpu


def _se_kernel(x_ref, w1t_ref, b1_ref, w2t_ref, b2_ref, o_ref, *,
               channels_last, inv_hw):
    # x_ref / o_ref: (NB, HW, C) if channels_last else (NB, C, HW)
    # w1t_ref: (C, SE)  b1_ref: (1, SE)  w2t_ref: (SE, C)  b2_ref: (1, C)
    reduce_axis = 1 if channels_last else 2

    # Global average pool (adaptive_avg_pool2d to 1x1), accumulated in f32.
    s = jnp.sum(x_ref[...].astype(jnp.float32), axis=reduce_axis)   # (NB, C)
    m = s * inv_hw                                                   # (NB, C)

    # dim_reduce: 1x1 conv == matmul, then ReLU.
    h = jnp.dot(m, w1t_ref[...],
                preferred_element_type=jnp.float32) + b1_ref[...]   # (NB, SE)
    h = jnp.maximum(h, 0.0)

    # dim_restore: 1x1 conv == matmul, then sigmoid.
    g = jnp.dot(h, w2t_ref[...],
                preferred_element_type=jnp.float32) + b2_ref[...]   # (NB, C)
    g = jax.nn.sigmoid(g)

    # Broadcast multiply over the spatial axis. Re-read x from the VMEM block
    # (don't keep the tile used for the mean live across the matmuls); scale
    # in f32, write back in the native I/O dtype.
    if channels_last:
        gb = g[:, None, :]
    else:
        gb = g[:, :, None]
    o_ref[...] = (x_ref[...].astype(jnp.float32) * gb).astype(o_ref.dtype)


def _largest_divisor_leq(n, cap):
    cap = max(1, min(n, int(cap)))
    for d in range(cap, 0, -1):
        if n % d == 0:
            return d
    return 1


def squeeze_excitate(x_nchw, w1, b1, w2, b2):
    """SqueezeExcitate forward.

    x_nchw: (N, C, H, W), any float dtype (kept as the I/O dtype).
    w1: (SE, C)  dim_reduce  Conv2d(k=1) weight (PyTorch (SE, C, 1, 1) squeezed)
    b1: (SE,)
    w2: (C, SE)  dim_restore Conv2d(k=1) weight
    b2: (C,)
    Returns (N, C, H, W) in the input dtype.
    """
    N, C, H, W = x_nchw.shape
    SE = w1.shape[0]
    HW = H * W
    dtype = x_nchw.dtype
    itemsize = jnp.dtype(dtype).itemsize

    # Layout: make the lane (last) axis 128-friendly.
    channels_last = (HW % 128 != 0)
    if channels_last:
        x = x_nchw.reshape(N, C, HW).transpose(0, 2, 1)   # (N, HW, C): C on lanes
    else:
        x = x_nchw.reshape(N, C, HW)                      # (N, C, HW): HW on lanes
    # (In a full network the producer would already emit the lane-dense layout;
    #  here the wrapper transpose is just layout plumbing for the NCHW API.)

    # Parameters live in f32 on the compute path.
    w1t = jnp.asarray(w1, jnp.float32).T                  # (C, SE)
    b1r = jnp.asarray(b1, jnp.float32).reshape(1, SE)
    w2t = jnp.asarray(w2, jnp.float32).T                  # (SE, C)
    b2r = jnp.asarray(b2, jnp.float32).reshape(1, C)

    # Batch-block size NB: amortize per-grid-step overhead, but keep
    # double-buffered input + output blocks within a budget that also fits
    # v7x (64 MiB physical VMEM per TensorCore).
    vmem_budget = 32 * 1024 * 1024
    block_bytes_per_batch = C * HW * itemsize
    nb_cap = max(1, vmem_budget // (4 * block_bytes_per_batch))  # 2 bufs x (in+out)
    NB = _largest_divisor_leq(N, nb_cap)
    grid = (N // NB,)

    if channels_last:
        xblock = (NB, HW, C)
    else:
        xblock = (NB, C, HW)

    param_bytes = 4 * (2 * C * SE + SE + C)
    vmem_needed = 4 * NB * block_bytes_per_batch + 2 * param_bytes
    vmem_limit = int(min(max(vmem_needed + (4 << 20), 16 << 20), 128 << 20))

    kernel = functools.partial(_se_kernel,
                               channels_last=channels_last,
                               inv_hw=float(1.0 / HW))

    out = pl.pallas_call(
        kernel,
        out_shape=jax.ShapeDtypeStruct(x.shape, dtype),
        grid_spec=pltpu.PrefetchScalarGridSpec(
            num_scalar_prefetch=0,
            grid=grid,
            in_specs=[
                pl.BlockSpec(xblock, lambda n: (n, 0, 0)),
                pl.BlockSpec((C, SE), lambda n: (0, 0)),   # resident weights
                pl.BlockSpec((1, SE), lambda n: (0, 0)),
                pl.BlockSpec((SE, C), lambda n: (0, 0)),
                pl.BlockSpec((1, C), lambda n: (0, 0)),
            ],
            out_specs=pl.BlockSpec(xblock, lambda n: (n, 0, 0)),
        ),
        compiler_params=pltpu.CompilerParams(
            dimension_semantics=("parallel",),
            vmem_limit_bytes=vmem_limit,
        ),
    )(x, w1t, b1r, w2t, b2r)

    if channels_last:
        out = out.transpose(0, 2, 1)
    return out.reshape(N, C, H, W)


def _reference(x, w1, b1, w2, b2):
    # Pure-JAX reference matching the PyTorch forward (compute in f32).
    xf = x.astype(jnp.float32)
    m = jnp.mean(xf, axis=(2, 3))                                        # (N, C)
    h = jnp.maximum(m @ jnp.asarray(w1, jnp.float32).T
                    + jnp.asarray(b1, jnp.float32), 0.0)                 # (N, SE)
    g = jax.nn.sigmoid(h @ jnp.asarray(w2, jnp.float32).T
                       + jnp.asarray(b2, jnp.float32))                   # (N, C)
    return xf * g[:, :, None, None]


if __name__ == "__main__":
    key = jax.random.PRNGKey(0)

    # Case 1: f32 input, HW % 128 == 0 -> (N, C, HW) layout (HW on lanes).
    N, C, H, W, SE = 2, 4, 16, 16, 2
    kx, k1, k2, k3, k4, key = jax.random.split(key, 6)
    x = jax.random.normal(kx, (N, C, H, W), dtype=jnp.float32)
    w1 = jax.random.normal(k1, (SE, C), dtype=jnp.float32) * 0.1
    b1 = jax.random.normal(k2, (SE,), dtype=jnp.float32) * 0.1
    w2 = jax.random.normal(k3, (C, SE), dtype=jnp.float32) * 0.1
    b2 = jax.random.normal(k4, (C,), dtype=jnp.float32) * 0.1

    out = jax.block_until_ready(squeeze_excitate(x, w1, b1, w2, b2))
    ref = _reference(x, w1, b1, w2, b2)
    assert out.shape == (N, C, H, W)
    assert out.dtype == jnp.float32
    assert jnp.allclose(out, ref, atol=1e-5, rtol=1e-5)

    # Case 2: bf16 I/O, HW = 49 (not 128-aligned) -> channels-last layout,
    # C = 128 on lanes; output stays bf16.
    N2, C2, H2, W2, SE2 = 2, 128, 7, 7, 8
    kx, k1, k2, k3, k4, key = jax.random.split(key, 6)
    x2 = jax.random.normal(kx, (N2, C2, H2, W2),
                           dtype=jnp.float32).astype(jnp.bfloat16)
    w1b = jax.random.normal(k1, (SE2, C2), dtype=jnp.float32) * 0.1
    b1b = jax.random.normal(k2, (SE2,), dtype=jnp.float32) * 0.1
    w2b = jax.random.normal(k3, (C2, SE2), dtype=jnp.float32) * 0.1
    b2b = jax.random.normal(k4, (C2,), dtype=jnp.float32) * 0.1

    out2 = jax.block_until_ready(squeeze_excitate(x2, w1b, b1b, w2b, b2b))
    ref2 = _reference(x2, w1b, b1b, w2b, b2b)
    assert out2.shape == (N2, C2, H2, W2)
    assert out2.dtype == jnp.bfloat16
    assert jnp.allclose(out2.astype(jnp.float32), ref2, atol=3e-2, rtol=3e-2)

    print("KERNEL_OK")
</pallas_src>

<mosaic_0001>
module attributes {stable_mosaic.version = 11 : i64} {
  func.func @_se_kernel(%arg0: i32, %arg1: memref<2x4x256xf32, #tpu.memory_space<vmem>>, %arg2: memref<4x2xf32, #tpu.memory_space<vmem>>, %arg3: memref<1x2xf32, #tpu.memory_space<vmem>>, %arg4: memref<2x4xf32, #tpu.memory_space<vmem>>, %arg5: memref<1x4xf32, #tpu.memory_space<vmem>>, %arg6: memref<2x4x256xf32, #tpu.memory_space<vmem>>) attributes {dimension_semantics = [#tpu.dimension_semantics<parallel>], iteration_bounds = array<i64: 1>, scalar_prefetch = 0 : i64, scratch_operands = 0 : i64, tpu.core_type = #tpu.core_type<tc>, window_params = [{transform_indices = @transform_0, window_bounds = array<i64: 2, 4, 256>}, {pipeline_mode = #tpu.pipeline_mode<synchronous>, transform_indices = @transform_1, window_bounds = array<i64: 4, 2>}, {pipeline_mode = #tpu.pipeline_mode<synchronous>, transform_indices = @transform_2, window_bounds = array<i64: 1, 2>}, {pipeline_mode = #tpu.pipeline_mode<synchronous>, transform_indices = @transform_3, window_bounds = array<i64: 2, 4>}, {pipeline_mode = #tpu.pipeline_mode<synchronous>, transform_indices = @transform_4, window_bounds = array<i64: 1, 4>}, {transform_indices = @transform_5, window_bounds = array<i64: 2, 4, 256>}]} {
    %c0 = arith.constant 0 : index
    %c0_0 = arith.constant 0 : index
    %c0_1 = arith.constant 0 : index
    %0 = vector.load %arg1[%c0, %c0_0, %c0_1] : memref<2x4x256xf32, #tpu.memory_space<vmem>>, vector<2x4x256xf32>
    %cst = arith.constant dense<0.000000e+00> : vector<2x4xf32>
    %1 = vector.multi_reduction <add>, %0, %cst [2] : vector<2x4x256xf32> to vector<2x4xf32>
    %cst_2 = arith.constant 3.906250e-03 : f32
    %2 = vector.broadcast %cst_2 : f32 to vector<2x4xf32>
    %3 = arith.mulf %1, %2 : vector<2x4xf32>
    %c0_3 = arith.constant 0 : index
    %c0_4 = arith.constant 0 : index
    %4 = vector.load %arg2[%c0_3, %c0_4] : memref<4x2xf32, #tpu.memory_space<vmem>>, vector<4x2xf32>
    %cst_5 = arith.constant dense<0.000000e+00> : vector<2x2xf32>
    %5 = tpu.matmul %3, %4, %cst_5 {dimension_numbers = #tpu.dot_dimension_numbers<[1], [0], [0], [1], [0, 0, 1, 1], [], []>} : vector<2x4xf32>, vector<4x2xf32>, vector<2x2xf32> -> vector<2x2xf32>
    %c0_6 = arith.constant 0 : index
    %c0_7 = arith.constant 0 : index
    %6 = vector.load %arg3[%c0_6, %c0_7] : memref<1x2xf32, #tpu.memory_space<vmem>>, vector<1x2xf32>
    %7 = vector.broadcast %6 : vector<1x2xf32> to vector<2x2xf32>
    %8 = arith.addf %5, %7 : vector<2x2xf32>
    %cst_8 = arith.constant 0.000000e+00 : f32
    %9 = vector.broadcast %cst_8 : f32 to vector<2x2xf32>
    %10 = arith.maximumf %8, %9 : vector<2x2xf32>
    %c0_9 = arith.constant 0 : index
    %c0_10 = arith.constant 0 : index
    %11 = vector.load %arg4[%c0_9, %c0_10] : memref<2x4xf32, #tpu.memory_space<vmem>>, vector<2x4xf32>
    %cst_11 = arith.constant dense<0.000000e+00> : vector<2x4xf32>
    %12 = tpu.matmul %10, %11, %cst_11 {dimension_numbers = #tpu.dot_dimension_numbers<[1], [0], [0], [1], [0, 0, 1, 1], [], []>} : vector<2x2xf32>, vector<2x4xf32>, vector<2x4xf32> -> vector<2x4xf32>
    %c0_12 = arith.constant 0 : index
    %c0_13 = arith.constant 0 : index
    %13 = vector.load %arg5[%c0_12, %c0_13] : memref<1x4xf32, #tpu.memory_space<vmem>>, vector<1x4xf32>
    %14 = vector.broadcast %13 : vector<1x4xf32> to vector<2x4xf32>
    %15 = arith.addf %12, %14 : vector<2x4xf32>
    %16 = arith.negf %15 : vector<2x4xf32>
    %17 = math.exp %16 : vector<2x4xf32>
    %cst_14 = arith.constant 1.000000e+00 : f32
    %18 = vector.broadcast %cst_14 : f32 to vector<2x4xf32>
    %19 = arith.addf %18, %17 : vector<2x4xf32>
    %20 = arith.divf %18, %19 : vector<2x4xf32>
    %21 = vector.shape_cast %20 : vector<2x4xf32> to vector<2x4x1xf32>
    %c0_15 = arith.constant 0 : index
    %c0_16 = arith.constant 0 : index
    %c0_17 = arith.constant 0 : index
    %22 = vector.load %arg1[%c0_15, %c0_16, %c0_17] : memref<2x4x256xf32, #tpu.memory_space<vmem>>, vector<2x4x256xf32>
    %23 = vector.broadcast %21 : vector<2x4x1xf32> to vector<2x4x256xf32>
    %24 = arith.mulf %22, %23 : vector<2x4x256xf32>
    %c0_18 = arith.constant 0 : index
    %c0_19 = arith.constant 0 : index
    %c0_20 = arith.constant 0 : index
    %25 = vector.load %arg6[%c0_18, %c0_19, %c0_20] : memref<2x4x256xf32, #tpu.memory_space<vmem>>, vector<2x4x256xf32>
    tpu.vector_store %arg6[%c0_18, %c0_19, %c0_20], %24 {strides = array<i32>} : memref<2x4x256xf32, #tpu.memory_space<vmem>>, vector<2x4x256xf32>,
    return
  }
  func.func @transform_0(%arg0: i32) -> (i32, i32, i32) {
    %c0_i32 = arith.constant 0 : i32
    %c0_i32_0 = arith.constant 0 : i32
    %c0_i32_1 = arith.constant 0 : i32
    return %arg0, %c0_i32, %c0_i32_0 : i32, i32, i32
  }
  func.func @transform_1(%arg0: i32) -> (i32, i32) {
    %c0_i32 = arith.constant 0 : i32
    %c0_i32_0 = arith.constant 0 : i32
    %c0_i32_1 = arith.constant 0 : i32
    return %c0_i32, %c0_i32_0 : i32, i32
  }
  func.func @transform_2(%arg0: i32) -> (i32, i32) {
    %c0_i32 = arith.constant 0 : i32
    %c0_i32_0 = arith.constant 0 : i32
    %c0_i32_1 = arith.constant 0 : i32
    return %c0_i32, %c0_i32_0 : i32, i32
  }
  func.func @transform_3(%arg0: i32) -> (i32, i32) {
    %c0_i32 = arith.constant 0 : i32
    %c0_i32_0 = arith.constant 0 : i32
    %c0_i32_1 = arith.constant 0 : i32
    return %c0_i32, %c0_i32_0 : i32, i32
  }
  func.func @transform_4(%arg0: i32) -> (i32, i32) {
    %c0_i32 = arith.constant 0 : i32
    %c0_i32_0 = arith.constant 0 : i32
    %c0_i32_1 = arith.constant 0 : i32
    return %c0_i32, %c0_i32_0 : i32, i32
  }
  func.func @transform_5(%arg0: i32) -> (i32, i32, i32) {
    %c0_i32 = arith.constant 0 : i32
    %c0_i32_0 = arith.constant 0 : i32
    %c0_i32_1 = arith.constant 0 : i32
    return %arg0, %c0_i32, %c0_i32_0 : i32, i32, i32
  }
}

</mosaic_0001>

<llo_original>
// kernel: tpu_custom_call.1
$region0: #{tpu_custom_call.1}
  #allocation0 [shape = 'u32[]', space=smem, size = 0x4, offset = 0x4, fixed_abs, tag = 'smem constant byte address 0x4 - core index']
  #allocation1 [shape = 'u32[72,128]{1,0:T(1,128)}', space=vmem, size = 0x9000, scoped, tag = 'internal scratch']
  %s0 = inlined_call_operand.hbm [shape: f32[2,4,256], index: 0, kind: input, shape index: {}]
  %s1 = inlined_call_operand.vmem [shape: f32[4,2], index: 1, kind: input, shape index: {}]
  %s2 = inlined_call_operand.vmem [shape: f32[1,2], index: 2, kind: input, shape index: {}]
  %s3 = inlined_call_operand.vmem [shape: f32[2,4], index: 3, kind: input, shape index: {}]
  %s4 = inlined_call_operand.vmem [shape: f32[1,4], index: 4, kind: input, shape index: {}]
  %s5 = inlined_call_operand.hbm [shape: f32[2,4,256], index: 5, kind: output, shape index: {}]
  %s6 = sld [smem:[#allocation0]]
  $region34: #{tpu_custom_call.1} parent=0
    _
  %s8 = ssub.s32 1, %s6
  %s9 = scalar_select 0, %s8, %s6
  $region1: #{tpu_custom_call.1} parent=0
    #allocation2 [shape = 'u8[8192]{0}', space=vmem, size = 0x2000, scoped, tag = 'input window, operand 0, single buffered']
    #allocation3 [shape = 's32[1]{0}', space=sflag, size = 0x4, scoped, tag = 'scoped memory for tpu_custom_call.1']
    #allocation4 [shape = 's32[1]{0}', space=sflag, size = 0x4, scoped, tag = 'scoped memory for tpu_custom_call.1']
    #allocation5 [shape = 'u8[8192]{0}', space=vmem, size = 0x2000, scoped, tag = 'output window, operand 0, single buffered']
    %10 = vsyncpa [#allocation3], 0
    %11 = vsyncpa [#allocation4], 0
    // Predicated region
    $region2: #{tpu_custom_call.1} parent=1 // pred_check
      _
    $region3: #{tpu_custom_call.1} parent=1 // pred_check_branch
      %13 = sbr.rel (0) target = $region5
    $region4: #{tpu_custom_call.1} parent=1 // pred_region
      %15 = vsyncadd [#allocation3], 0
      %s16 = sshll.u32 %s0, 4
      %s17 = int_to_ptr.hbm [resolvable:$true] %s16
      %s18 = sshll.u32 [#allocation2], 4
      %s19 = int_to_ptr.vmem [resolvable:$true] %s18
      %24 = dma.hbm_to_vmem [thread:$0]  %s17, 256, %s19, [#allocation3], 128, 128, 8
    $region5: #{tpu_custom_call.1} parent=1 // pred_fallthru
      _
    // Predicated region
    $region6: #{tpu_custom_call.1} parent=1 // pred_check
      _
    $region7: #{tpu_custom_call.1} parent=1 // pred_check_branch
      %26 = sbr.rel (0) target = $region9
    $region8: #{tpu_custom_call.1} parent=1 // pred_region
      _
    $region9: #{tpu_custom_call.1} parent=1 // pred_fallthru
      _
    // Predicated region
    $region10: #{tpu_custom_call.1} parent=1 // pred_check
      _
    $region11: #{tpu_custom_call.1} parent=1 // pred_check_branch
      %28 = sbr.rel (0) target = $region13
    $region12: #{tpu_custom_call.1} parent=1 // pred_region
      _
    $region13: #{tpu_custom_call.1} parent=1 // pred_fallthru
      _
    // Predicated region
    $region14: #{tpu_custom_call.1} parent=1 // pred_check
      _
    $region15: #{tpu_custom_call.1} parent=1 // pred_check_branch
      %30 = sbr.rel (0) target = $region17
    $region16: #{tpu_custom_call.1} parent=1 // pred_region
      _
    $region17: #{tpu_custom_call.1} parent=1 // pred_fallthru
      _
    // Predicated region
    $region18: #{tpu_custom_call.1} parent=1 // pred_check
      _
    $region19: #{tpu_custom_call.1} parent=1 // pred_check_branch
      %32 = sbr.rel (0) target = $region21
    $region20: #{tpu_custom_call.1} parent=1 // pred_region
      _
    $region21: #{tpu_custom_call.1} parent=1 // pred_fallthru
      _
    // Predicated region
    $region22: #{tpu_custom_call.1} parent=1 // pred_check
      _
    $region23: #{tpu_custom_call.1} parent=1 // pred_check_branch
      %34 = sbr.rel (0) target = $region25
    $region24: #{tpu_custom_call.1} parent=1 // pred_region
      %36 = dma.done [#allocation3], 256
    $region25: #{tpu_custom_call.1} parent=1 // pred_fallthru
      _
    %v37 = vld [vmem:[#allocation2] sm:$0xff]
    %v38 = vld [vmem:[#allocation2 + $0x8] sm:$0xff]
    %41 = vst [vmem:[#allocation1] ss:$2 sm:$0xff] %v37
    %v42 = vld.sshfl [vmem:[#allocation1] sm:$0xff pattern:$0x75316420]
    %v43 = vld.sshfl [vmem:[#allocation1 + $0x8] sm:$0xff pattern:$0x75316420]
    %s44 = scalar_lea.vmem [#allocation1], 16
    %45 = vst [vmem:[%s44] ss:$2 sm:$0xff] %v38
    %v46 = vld.sshfl [vmem:[#allocation1 + $0x10] sm:$0xff pattern:$0x75316420]
    %v47 = vld.sshfl [vmem:[#allocation1 + $0x18] sm:$0xff pattern:$0x75316420]
    %vm52 = vcmask 1043456
    %v53 = vsel %vm52, %v42, 0.0
    %v54 = vsel %vm52, %v43, 0.0
    %v55 = vadd.f32 %v53, %v54
    %56 = vadd.xlane.f32.xlu0 %v55
    %v57 = vpop.xlane.xlu0 %56
    %v58 = vsel %vm52, %v46, 0.0
    %v59 = vsel %vm52, %v47, 0.0
    %v60 = vadd.f32 %v58, %v59
    %61 = vadd.xlane.f32.xlu0 %v60
    %v62 = vpop.xlane.xlu0 %61
    %v63 = vmul.f32 %v57, 0.00390625
    %v64 = vmul.f32 %v62, 0.00390625
    %v65 = vld [vmem:[%s1] sm:$0xf]
    %v66 = vld [vmem:[%s2] sm:$0x1]
    %v68 = vperm.slane %v66, 0
    %v72 = vlaneseq
    %v73 = vand.u32 %v72, 127
    %v74 = vperm.slane %v63, %v73
    %v75 = vperm.slane %v64, %v73
    %vm76 = vcmask 1041409
    %v77 = vsel %vm76, %v75, %v74
    %vm78 = vcmask 31744
    %v79 = vsel %vm78, %v77, 0
    %v82 = vsel %vm52, %v65, 0
    %84 = vmatpush.msra.mxu0 0.0
    %85 = vmatpush.msra.mxu0 0.0
    %86 = vmatpush.msra.mxu0 0.0
    %87 = vmatpush.msra.mxu0 0.0
    %88 = vmatpush.msra.mxu0 0.0
    %89 = vmatpush.msra.mxu0 0.0
    %90 = vmatpush.msra.mxu0 0.0
    %91 = vmatpush.msra.mxu0 0.0
    %92 = vmatpush.msra.mxu0 0.0
    %93 = vmatpush.msra.mxu0 0.0
    %94 = vmatpush.msra.mxu0 0.0
    %95 = vmatpush.msra.mxu0 0.0
    %96 = vmatpush.msra.mxu0 0.0
    %97 = vmatpush.msra.mxu0 0.0
    %98 = vmatpush.msra.mxu0 0.0
    %99 = vmatpush.msra.mxu0 %v82
    %100 = vmatmul.f32.gmra.mxu0 %v79
    %v101 = vpop.f32.mrf.mxu0
    %v102 = vadd.f32 %v68, %v101
    %103 = vdwg.mxu0
    %v104 = vmax.f32 %v102, 0.0
    %v105 = vld [vmem:[%s3] sm:$0x3]
    %v106 = vld [vmem:[%s4] sm:$0x1]
    %v108 = vperm.slane %v106, 0
    %vm110 = vcmask 15360
    %v112 = vsel %vm110, %v104, 0
    %vm114 = vcmask 1041408
    %v116 = vsel %vm114, %v105, 0
    %118 = vmatpush.msra.mxu0 0.0
    %119 = vmatpush.msra.mxu0 0.0
    %120 = vmatpush.msra.mxu0 0.0
    %121 = vmatpush.msra.mxu0 0.0
    %122 = vmatpush.msra.mxu0 0.0
    %123 = vmatpush.msra.mxu0 0.0
    %124 = vmatpush.msra.mxu0 0.0
    %125 = vmatpush.msra.mxu0 0.0
    %126 = vmatpush.msra.mxu0 0.0
    %127 = vmatpush.msra.mxu0 0.0
    %128 = vmatpush.msra.mxu0 0.0
    %129 = vmatpush.msra.mxu0 0.0
    %130 = vmatpush.msra.mxu0 0.0
    %131 = vmatpush.msra.mxu0 0.0
    %132 = vmatpush.msra.mxu0 0.0
    %133 = vmatpush.msra.mxu0 %v116
    %134 = vmatmul.f32.gmra.mxu0 %v112
    %v135 = vpop.f32.mrf.mxu0
    %v136 = vadd.f32 %v108, %v135
    %137 = vdwg.mxu0
    %v138 = vxor.u32 %v136, 2147483648
    %v139 = vmul.f32 %v138, 1.442695
    %v140 = vpow.pop %v139
    %v141 = vadd.f32 %v140, 1.0
    %v142 = vrcp.pop %v141
    %v143 = vmul.f32 %v141, %v142
    %v144 = vsub.f32 1.0, %v143
    %v145 = vmul.f32 %v142, %v144
    %v146 = vadd.f32 %v142, %v145
    %vm147 = vweird.f32 %v141
    %vm148 = vweird.f32 %v142
    %vm149 = vmor %vm147, %vm148
    %v150 = vsel %vm149, %v142, %v146
    %v151 = vand.u32 2147483647, %v141
    %vm152 = vcmp.eq.f32.partialorder %v151, 8.507059e+37
    %v153 = vand.u32 %v141, 2147483648
    %v154 = vor.u32 1.1754944e-38, %v153
    %v155 = vsel %vm152, %v154, %v150
    %v156 = vmul.f32 1.0, %v155
    %v157 = vperm.slane %v156, 0
    %v158 = vlaneseq
    %v159 = vshrl.u32 %v158, 7
    %161 = vset.pattern.permute.xlu0 %v159
    %162 = vperm.xlu0 %161, %v157
    %v163 = vpop.permute.xlu0 %162
    %v164 = vperm.slane %v156, 1
    %v165 = vlaneseq
    %v166 = vshrl.u32 %v165, 7
    %168 = vset.pattern.permute.xlu0 %v166
    %169 = vperm.xlu0 %168, %v164
    %v170 = vpop.permute.xlu0 %169
    %v174 = vunpack.c.l.s4 839922192
    %v175 = vunpack.c.0.s8 %v174
    %v176 = vperm.slane %v163, %v175
    %v178 = vunpack.c.l.s4 839922192
    %v179 = vunpack.c.0.s8 %v178
    %v180 = vperm.slane %v170, %v179
    %v183 = vmul.f32 %v37, %v176
    %v184 = vmul.f32 %v38, %v180
    %185 = vst [vmem:[#allocation5] sm:$0xff] %v183
    %186 = vst [vmem:[#allocation5 + $0x8] sm:$0xff] %v184
    // Predicated region
    $region26: #{tpu_custom_call.1} parent=1 // pred_check
      _
    $region27: #{tpu_custom_call.1} parent=1 // pred_check_branch
      %188 = sbr.rel (0) target = $region29
    $region28: #{tpu_custom_call.1} parent=1 // pred_region
      %190 = vsyncadd [#allocation4], 0
      %s191 = sshll.u32 [#allocation5], 4
      %s192 = int_to_ptr.vmem [resolvable:$true] %s191
      %s193 = sshll.u32 %s5, 4
      %s194 = int_to_ptr.hbm [resolvable:$true] %s193
      %199 = dma.vmem_to_hbm [thread:$0]  %s192, 256, %s194, [#allocation4], 128, 128, 8
    $region29: #{tpu_custom_call.1} parent=1 // pred_fallthru
      _
    // Predicated region
    $region30: #{tpu_custom_call.1} parent=1 // pred_check
      _
    $region31: #{tpu_custom_call.1} parent=1 // pred_check_branch
      %201 = sbr.rel (0) target = $region33
    $region32: #{tpu_custom_call.1} parent=1 // pred_region
      %203 = dma.done [#allocation4], 256
    $region33: #{tpu_custom_call.1} parent=1 // pred_fallthru
      _
    %204 = vsyncpa [#allocation3], 1
    %205 = vsyncpa [#allocation4], 1

</llo_original>
